<compile_context>
chip_gen: v6e
topology: v6e:2x2x1
jax: 0.10.0
libtpu: 0.0.40
codegen_flags: <defaults>
</compile_context>

<pallas_src>
import functools
from types import SimpleNamespace

import jax
import jax.numpy as jnp
from jax.experimental import pallas as pl
from jax.experimental.pallas import tpu as pltpu

VMEM = pltpu.MemorySpace.VMEM
SMEM = pltpu.MemorySpace.SMEM


def _round_up(x, m):
    return ((x + m - 1) // m) * m


# ----------------------------------------------------------------------------
# GAT core kernel (attention + scatter-softmax-aggregate), all heads fused.
#   per-head column block layout (width blk, 128-aligned):
#     cols 0..out_f-1 : edge_m   (a_h @ edge_h)
#     col  out_f      : logit    (a2_h @ edge_m)   -> turned into edge_e / rowsum
#     cols out_f+1..  : zero padding
# ----------------------------------------------------------------------------
def _gat_core_kernel(out_f, blk, nheads, alpha, concat,
                     dst_ref, feat_ref, aT_ref, o_ref, acc_ref):
    i = pl.program_id(0)                  # node-tile index  ("parallel")
    k = pl.program_id(1)                  # edge-tile index  ("arbitrary" reduction)

    @pl.when(k == 0)
    def _init():
        acc_ref[...] = jnp.zeros_like(acc_ref)

    feats = feat_ref[...]                                    # (te, F)            bf16
    a_t = aT_ref[...]                                        # (F, nheads*blk)    bf16
    edge_m = jnp.dot(feats, a_t, preferred_element_type=jnp.float32)   # (te, nheads*blk)

    w_blocks = []
    for h in range(nheads):
        b = edge_m[:, h * blk:(h + 1) * blk]                 # (te, blk)  aligned slice
        logit = b[:, out_f:out_f + 1]                        # (te, 1)
        powers = -jnp.where(logit > 0, logit, alpha * logit)  # -LeakyReLU
        # TODO(synk): as in the PyTorch reference there is no max-subtraction
        # before exp; inputs are L2-normalized so `powers` stays bounded.
        edge_e = jnp.exp(powers)                             # (te, 1) f32
        lane = jax.lax.broadcasted_iota(jnp.int32, b.shape, 1)
        base = jnp.where(lane == out_f, 1.0, b)              # logit col -> 1.0 (rowsum)
        w_blocks.append((base * edge_e).astype(jnp.bfloat16))
    edge_w = w_blocks[0] if nheads == 1 else jnp.concatenate(w_blocks, axis=1)

    dst = dst_ref[...]                                       # (1, te) int32 (-1 = pad)
    tn = acc_ref.shape[0]
    te = dst.shape[1]
    rows = jax.lax.broadcasted_iota(jnp.int32, (tn, te), 0) + i * tn
    onehot = (rows == dst).astype(jnp.bfloat16)              # (tn, te), exact in bf16

    acc_ref[...] += jnp.dot(onehot, edge_w, preferred_element_type=jnp.float32)

    @pl.when(k == pl.num_programs(1) - 1)
    def _finalize():
        acc = acc_ref[...]                                   # (tn, nheads*blk) f32
        outs = []
        for h in range(nheads):
            a_blk = acc[:, h * blk:(h + 1) * blk]
            e_rowsum = jnp.maximum(a_blk[:, out_f:out_f + 1], 1e-12)
            h_prime = a_blk[:, :out_f] * pl.reciprocal(e_rowsum, approx=True)
            if concat:                                       # F.elu (alpha = 1)
                h_prime = jnp.where(h_prime > 0, h_prime, jnp.exp(h_prime) - 1.0)
            outs.append(h_prime)
        o_ref[...] = outs[0] if nheads == 1 else jnp.concatenate(outs, axis=1)


def gat_core(a_list, a2_list, edge_feats, dst, num_nodes, *, alpha, concat,
             tn=256, te=512):
    """Fused multi-head GraphAttentionLayer forward.
       a_list[h]:(out_f,F)  a2_list[h]:(1,out_f)  edge_feats:(E,F)  dst:(E,)
       Returns (num_nodes, nheads*out_f) f32 (per-head outputs concatenated)."""
    out_f, F = a_list[0].shape
    nheads = len(a_list)
    blk = _round_up(out_f + 1, 128)                          # 128-aligned head block
    E = edge_feats.shape[0]

    exts = []
    for a, a2 in zip(a_list, a2_list):
        ext = jnp.concatenate(
            [a, a2 @ a, jnp.zeros((blk - out_f - 1, F), a.dtype)], axis=0)  # (blk, F)
        exts.append(ext)
    a_t = jnp.concatenate(exts, axis=0).T.astype(jnp.bfloat16)  # (F, nheads*blk)

    tn = min(tn, _round_up(num_nodes, 8))
    te = min(te, _round_up(E, 128))
    n_pad = _round_up(num_nodes, tn)
    e_pad = _round_up(E, te)

    feats = jnp.pad(edge_feats.astype(jnp.bfloat16), ((0, e_pad - E), (0, 0)))
    dst_pad = jnp.pad(dst.astype(jnp.int32)[None, :], ((0, 0), (0, e_pad - E)),
                      constant_values=-1)

    width = nheads * blk
    grid = (n_pad // tn, e_pad // te)
    out = pl.pallas_call(
        functools.partial(_gat_core_kernel, out_f, blk, nheads, alpha, concat),
        out_shape=jax.ShapeDtypeStruct((n_pad, nheads * out_f), jnp.float32),
        grid=grid,
        in_specs=[
            pl.BlockSpec((1, te), lambda i, k: (0, k)),          # dst indices
            pl.BlockSpec((te, F), lambda i, k: (k, 0)),          # edge features
            pl.BlockSpec((F, width), lambda i, k: (0, 0)),       # folded weights
        ],
        out_specs=pl.BlockSpec((tn, nheads * out_f), lambda i, k: (i, 0)),
        scratch_shapes=[pltpu.VMEM((tn, width), jnp.float32)],
        compiler_params=pltpu.CompilerParams(
            dimension_semantics=("parallel", "arbitrary")),
    )(dst_pad, feats, a_t)
    return out[:num_nodes]


# ----------------------------------------------------------------------------
# Dense matmul (relation / entity linear transforms), tiled over rows
# ----------------------------------------------------------------------------
def _matmul_kernel(a_ref, b_ref, o_ref):
    o_ref[...] = jnp.dot(a_ref[...], b_ref[...], preferred_element_type=jnp.float32)


def matmul(a, b, *, tm=512):
    M, K = a.shape
    N = b.shape[1]
    tm = min(tm, _round_up(M, 8))
    m_pad = _round_up(M, tm)
    a_pad = jnp.pad(a, ((0, m_pad - M), (0, 0)))
    out = pl.pallas_call(
        _matmul_kernel,
        out_shape=jax.ShapeDtypeStruct((m_pad, N), jnp.float32),
        grid=(m_pad // tm,),
        in_specs=[pl.BlockSpec((tm, K), lambda i: (i, 0)),
                  pl.BlockSpec((K, N), lambda i: (0, 0))],
        out_specs=pl.BlockSpec((tm, N), lambda i: (i, 0)),
        compiler_params=pltpu.CompilerParams(dimension_semantics=("parallel",)),
    )(a_pad, b)
    return out[:M]


# ----------------------------------------------------------------------------
# ConvKB kernel (conv2d(1->C, (1,3)) + ReLU + Linear(C*D -> 1))
#   layout: D on sublanes, triple/entity index on lanes -> lane-dense output.
#   Operands with lane-dim 1 (per-triple fixed vectors in ranking mode) are
#   folded at (D,1) cost before the single full-width multiply/add.
# ----------------------------------------------------------------------------
def _convkb_kernel(C, wsc_ref, fcw_ref, h_ref, r_ref, t_ref, o_ref):
    def squash(ref):
        v = ref[...]
        return v.reshape(v.shape[-2], v.shape[-1])           # -> (D, lanes) or (D, 1)

    h = squash(h_ref)
    r = squash(r_ref)
    t = squash(t_ref)
    D = h.shape[0]
    lanes = max(h.shape[1], r.shape[1], t.shape[1])

    def chan_body(c, acc):
        w0 = wsc_ref[4 * c + 0]
        w1 = wsc_ref[4 * c + 1]
        w2 = wsc_ref[4 * c + 2]
        cb = wsc_ref[4 * c + 3]
        narrow = cb                                           # scalar / (D,1) terms
        wide = None                                           # full (D, lanes) terms
        for w, x in ((w0, h), (w1, r), (w2, t)):
            if x.shape[1] == 1:
                narrow = narrow + w * x
            else:
                term = w * x
                wide = term if wide is None else wide + term
        if wide is None:
            conv = jnp.broadcast_to(narrow, (D, lanes))
        else:
            conv = wide + narrow
        act = jnp.maximum(conv, 0.0)                          # ReLU (dropout = id)
        fcw_row = fcw_ref[c]                                  # (1, D)
        return acc + jnp.dot(fcw_row, act, preferred_element_type=jnp.float32)

    score = jax.lax.fori_loop(0, C, chan_body, jnp.zeros((1, lanes), jnp.float32))
    o_ref[...] = (score + wsc_ref[4 * C]).reshape(o_ref.shape)


def _pack_convkb(params):
    conv_w, conv_b = params["conv_w"], params["conv_b"]
    fc_w, fc_b = params["fc_w"], params["fc_b"]
    C = conv_w.shape[0]
    D = fc_w.shape[1] // C
    taps = conv_w.reshape(C, 3).astype(jnp.float32)
    wsc = jnp.concatenate(
        [jnp.concatenate([taps, conv_b.reshape(C, 1)], axis=1).reshape(-1),
         fc_b.reshape(-1)]).astype(jnp.float32)               # (4*C + 1,) scalars
    fcw3 = fc_w.reshape(C, D)[:, None, :].astype(jnp.float32)  # (C, 1, D)
    return wsc, fcw3


def convkb_score(head, rela, tail, wsc, fcw3, *, tb=512):
    """'ConvKB' mode: head/rela/tail (B, D) -> (B, 1) scores."""
    B, D = head.shape
    C = fcw3.shape[0]
    tb = min(tb, _round_up(B, 128))
    b_pad = _round_up(B, tb)

    def pad_t(x):
        return jnp.pad(x.T.astype(jnp.float32), ((0, 0), (0, b_pad - B)))

    spec = pl.BlockSpec((D, tb), lambda i: (0, i))
    out = pl.pallas_call(
        functools.partial(_convkb_kernel, C),
        out_shape=jax.ShapeDtypeStruct((1, b_pad), jnp.float32),
        grid=(b_pad // tb,),
        in_specs=[pl.BlockSpec(memory_space=SMEM),
                  pl.BlockSpec(fcw3.shape, lambda i: (0, 0, 0)),
                  spec, spec, spec],
        out_specs=pl.BlockSpec((1, tb), lambda i: (0, i)),
        compiler_params=pltpu.CompilerParams(dimension_semantics=("parallel",)),
    )(wsc, fcw3, pad_t(head), pad_t(rela), pad_t(tail))
    return out[0, :B][:, None]


def convkb_rank(ent, fix1, fix2, mode, wsc, fcw3, *, te=512):
    """head-/tail-batch ranking: scores every entity against T fixed triples.
       head-batch: (fix1, fix2) = (rel rows, tail rows),  entity is the head.
       tail-batch: (fix1, fix2) = (head rows, rel rows),  entity is the tail.
       Returns (T, num_ent)."""
    num_ent, D = ent.shape
    T = fix1.shape[0]
    C = fcw3.shape[0]
    te = min(te, _round_up(num_ent, 128))
    e_pad = _round_up(num_ent, te)

    ent_t = jnp.pad(ent.T.astype(jnp.float32), ((0, 0), (0, e_pad - num_ent)))
    f1 = fix1.astype(jnp.float32)[:, :, None]                 # (T, D, 1)
    f2 = fix2.astype(jnp.float32)[:, :, None]

    var_spec = pl.BlockSpec((D, te), lambda i, j: (0, i))     # entity tile (resident over j)
    fix_spec = pl.BlockSpec((1, D, 1), lambda i, j: (j, 0, 0))

    if mode == "head-batch":
        specs = (var_spec, fix_spec, fix_spec)                # h varies; r, t fixed
        args = (ent_t, f1, f2)
    else:                                                     # tail-batch
        specs = (fix_spec, fix_spec, var_spec)                # h, r fixed; t varies
        args = (f1, f2, ent_t)

    out = pl.pallas_call(
        functools.partial(_convkb_kernel, C),
        out_shape=jax.ShapeDtypeStruct((T, 1, e_pad), jnp.float32),
        grid=(e_pad // te, T),
        in_specs=[pl.BlockSpec(memory_space=SMEM),
                  pl.BlockSpec(fcw3.shape, lambda i, j: (0, 0, 0)),
                  *specs],
        out_specs=pl.BlockSpec((1, 1, te), lambda i, j: (j, 0, i)),
        compiler_params=pltpu.CompilerParams(
            dimension_semantics=("parallel", "arbitrary")),
    )(wsc, fcw3, *args)
    return out[:, 0, :num_ent]


# ----------------------------------------------------------------------------
# TransE-style L1 score for the GAT path (lane-dense output)
# ----------------------------------------------------------------------------
def _l1_kernel(h_ref, r_ref, t_ref, o_ref):
    o_ref[...] = jnp.sum(jnp.abs(h_ref[...] + r_ref[...] - t_ref[...]),
                         axis=0, keepdims=True)


def gat_score(h, r, t, *, tb=512):
    B, D = h.shape
    tb = min(tb, _round_up(B, 128))
    b_pad = _round_up(B, tb)

    def pad_t(x):
        return jnp.pad(x.T.astype(jnp.float32), ((0, 0), (0, b_pad - B)))

    spec = pl.BlockSpec((D, tb), lambda i: (0, i))
    out = pl.pallas_call(
        _l1_kernel,
        out_shape=jax.ShapeDtypeStruct((1, b_pad), jnp.float32),
        grid=(b_pad // tb,),
        in_specs=[spec, spec, spec],
        out_specs=pl.BlockSpec((1, tb), lambda i: (0, i)),
        compiler_params=pltpu.CompilerParams(dimension_semantics=("parallel",)),
    )(pad_t(h), pad_t(r), pad_t(t))
    return out[0, :B]                                         # (B,) like torch.norm(p=1, dim=1)


# ----------------------------------------------------------------------------
# Model glue (gathers, concatenations, normalization)
# ----------------------------------------------------------------------------
def l2_normalize(x, eps=1e-12):
    n = jnp.sqrt(jnp.sum(x * x, axis=1, keepdims=True))
    return x / jnp.maximum(n, eps)


def forward_GAT(params, triples, adj_matrix, n_hop, *, alpha=0.2):
    edge_list, edge_type = adj_matrix
    edge_list_nhop = jnp.stack([n_hop[:, 3], n_hop[:, 0]], axis=0)    # (2, E2)
    edge_type_nhop = jnp.stack([n_hop[:, 1], n_hop[:, 2]], axis=1)    # (E2, 2)

    ent_emb = l2_normalize(params["ent_emb_out"])                     # F.normalize(.data)
    rel_emb = params["rel_emb_out"]
    N = ent_emb.shape[0]

    edge_all = jnp.concatenate([edge_list, edge_list_nhop], axis=1)   # (2, E)
    dst = edge_all[0]

    def build_feats(x, rel_out):
        emb = rel_out[edge_type]
        emb_nhop = rel_out[edge_type_nhop[:, 0]] + rel_out[edge_type_nhop[:, 1]]
        embed_all = jnp.concatenate([emb, emb_nhop], axis=0)          # (E, nrela)
        return jnp.concatenate([x[edge_all[0]], x[edge_all[1]], embed_all], axis=1)

    # first stage: both attention heads fused into one kernel call
    feats1 = build_feats(ent_emb, rel_emb)
    ent_out = gat_core([lp["a"] for lp in params["attentions"]],
                       [lp["a_2"] for lp in params["attentions"]],
                       feats1, dst, N, alpha=alpha, concat=True)      # dropout = identity

    # relation transform + second attention stage
    rel_out = matmul(rel_emb, params["W"])                            # (num_rel, 2*out_dim)
    feats2 = build_feats(ent_out, rel_out)
    ent_out = gat_core([params["out_att"]["a"]], [params["out_att"]["a_2"]],
                       feats2, dst, N, alpha=alpha, concat=False)
    ent_out = jnp.where(ent_out > 0, ent_out, jnp.exp(ent_out) - 1.0)  # F.elu

    mask = jnp.zeros((N,), jnp.float32).at[triples[:, 2]].set(1.0)
    entities_upgraded = matmul(ent_emb, params["W_entities"])
    ent_final = l2_normalize(entities_upgraded + mask[:, None] * ent_out)
    # NOTE: torch also writes ent_final / rel_out back into
    # entity_embeddings.data / relation_embeddings.data; score-only forward here.

    head_emb = ent_final[triples[:, 0]]
    rela_emb = rel_out[triples[:, 1]]
    tail_emb = ent_final[triples[:, 2]]
    return gat_score(head_emb, rela_emb, tail_emb)


def forward_Con(params, triples, mode):
    ent = params["entity_embeddings"]
    rel = params["relation_embeddings"]
    wsc, fcw3 = _pack_convkb(params)
    if mode == "ConvKB":
        return convkb_score(ent[triples[:, 0]], rel[triples[:, 1]],
                            ent[triples[:, 2]], wsc, fcw3)
    if mode == "head-batch":
        return convkb_rank(ent, rel[triples[:, 1]], ent[triples[:, 2]],
                           "head-batch", wsc, fcw3)
    # tail-batch
    return convkb_rank(ent, ent[triples[:, 0]], rel[triples[:, 1]],
                       "tail-batch", wsc, fcw3)


def forward(params, triples, mode, adj_matrix=None, n_hop=None):
    if mode == "GAT":
        return forward_GAT(params, triples, adj_matrix, n_hop)
    return forward_Con(params, triples, mode)


# ----------------------------------------------------------------------------
# Deterministic parameter initialization (shapes per KBAT.__init__)
# ----------------------------------------------------------------------------
def xavier_normal(key, shape, gain=1.414):
    fan_out, fan_in = shape[0], shape[1]
    std = gain * (2.0 / (fan_in + fan_out)) ** 0.5
    return std * jax.random.normal(key, shape, dtype=jnp.float32)


def xavier_uniform(key, shape, gain=1.414):
    if len(shape) == 2:
        fan_out, fan_in = shape
    else:  # conv weight (out, in, kh, kw)
        rf = 1
        for s in shape[2:]:
            rf *= s
        fan_in, fan_out = shape[1] * rf, shape[0] * rf
    a = gain * (6.0 / (fan_in + fan_out)) ** 0.5
    return jax.random.uniform(key, shape, jnp.float32, -a, a)


def init_params(key, args):
    num_ent, num_rel, emb_dim = args.num_ent, args.num_rel, args.emb_dim
    nheads, out_dim, n_chan = 2, 100, 50   # hardcoded in the PyTorch module
    ks = jax.random.split(key, 14)
    p = {}
    p["ent_emb_out"] = jax.random.normal(ks[0], (num_ent, emb_dim), jnp.float32)
    p["rel_emb_out"] = jax.random.normal(ks[1], (num_rel, emb_dim), jnp.float32)
    p["entity_embeddings"] = jax.random.normal(ks[2], (num_ent, out_dim * nheads), jnp.float32)
    p["relation_embeddings"] = jax.random.normal(ks[3], (num_rel, out_dim * nheads), jnp.float32)
    p["attentions"] = []
    for i in range(nheads):
        ka, kb = jax.random.split(ks[4 + i])
        p["attentions"].append({
            "a": xavier_normal(ka, (out_dim, 2 * emb_dim + emb_dim)),
            "a_2": xavier_normal(kb, (1, out_dim)),
        })
    p["W"] = xavier_uniform(ks[6], (emb_dim, nheads * out_dim))
    ka, kb = jax.random.split(ks[7])
    d = out_dim * nheads
    p["out_att"] = {"a": xavier_normal(ka, (d, 2 * d + d)),
                    "a_2": xavier_normal(kb, (1, d))}
    p["W_entities"] = xavier_uniform(ks[8], (emb_dim, d))
    # ConvKB
    p["conv_w"] = xavier_uniform(ks[9], (n_chan, 1, 1, 3))
    p["conv_b"] = 0.01 * jax.random.normal(ks[10], (n_chan,), jnp.float32)
    p["fc_w"] = xavier_uniform(ks[11], (1, n_chan * d))            # Linear(10000, 1)
    p["fc_b"] = jnp.zeros((1,), jnp.float32)
    return p


# ----------------------------------------------------------------------------
if __name__ == "__main__":
    args = SimpleNamespace(num_ent=16, num_rel=8, emb_dim=32)
    key = jax.random.PRNGKey(0)
    kp, kd = jax.random.split(key)
    params = init_params(kp, args)

    E1, E2, B = 12, 6, 4
    k1, k2, k3, k4, k5, k6, k7, k8, k9 = jax.random.split(kd, 9)
    edge_list = jax.random.randint(k1, (2, E1), 0, args.num_ent, dtype=jnp.int32)
    edge_type = jax.random.randint(k2, (E1,), 0, args.num_rel, dtype=jnp.int32)
    n_hop = jnp.stack([
        jax.random.randint(k3, (E2,), 0, args.num_ent, dtype=jnp.int32),
        jax.random.randint(k4, (E2,), 0, args.num_rel, dtype=jnp.int32),
        jax.random.randint(k5, (E2,), 0, args.num_rel, dtype=jnp.int32),
        jax.random.randint(k6, (E2,), 0, args.num_ent, dtype=jnp.int32),
    ], axis=1)                                                     # (E2, 4)
    triples = jnp.stack([
        jax.random.randint(k7, (B,), 0, args.num_ent, dtype=jnp.int32),
        jax.random.randint(k8, (B,), 0, args.num_rel, dtype=jnp.int32),
        jax.random.randint(k9, (B,), 0, args.num_ent, dtype=jnp.int32),
    ], axis=1)                                                     # (B, 3)

    gat_scores = forward(params, triples, "GAT",
                         adj_matrix=(edge_list, edge_type), n_hop=n_hop)
    conv_scores = forward(params, triples, "ConvKB")
    rank_scores = forward(params, triples[:2], "head-batch")
    tail_scores = forward(params, triples[:2], "tail-batch")
    jax.block_until_ready((gat_scores, conv_scores, rank_scores, tail_scores))

    assert gat_scores.shape == (B,)
    assert conv_scores.shape == (B, 1)
    assert rank_scores.shape == (2, args.num_ent)
    assert tail_scores.shape == (2, args.num_ent)
    assert not bool(jnp.isnan(gat_scores).any() | jnp.isnan(conv_scores).any()
                    | jnp.isnan(rank_scores).any() | jnp.isnan(tail_scores).any())
    print("KERNEL_OK")
</pallas_src>

<mosaic_0001>
module attributes {stable_mosaic.version = 11 : i64} {
  func.func @_gat_core_kernel(%arg0: i32, %arg1: i32, %arg2: memref<1x128xi32, #tpu.memory_space<vmem>>, %arg3: memref<128x96xbf16, #tpu.memory_space<vmem>>, %arg4: memref<96x256xbf16, #tpu.memory_space<vmem>>, %arg5: memref<16x200xf32, #tpu.memory_space<vmem>>, %arg6: memref<16x256xf32, #tpu.memory_space<vmem>>) attributes {dimension_semantics = [#tpu.dimension_semantics<parallel>, #tpu.dimension_semantics<arbitrary>], iteration_bounds = array<i64: 1, 1>, scalar_prefetch = 0 : i64, scratch_operands = 1 : i64, tpu.core_type = #tpu.core_type<tc>, window_params = [{transform_indices = @transform_0, window_bounds = array<i64: 1, 128>}, {transform_indices = @transform_1, window_bounds = array<i64: 128, 96>}, {pipeline_mode = #tpu.pipeline_mode<synchronous>, transform_indices = @transform_2, window_bounds = array<i64: 96, 256>}, {transform_indices = @transform_3, window_bounds = array<i64: 16, 200>}]} {
    %c0_i32 = arith.constant 0 : i32
    %0 = arith.cmpi eq, %arg1, %c0_i32 : i32
    %1 = arith.extui %0 : i1 to i32
    %c0_i32_0 = arith.constant 0 : i32
    %2 = arith.cmpi ne, %1, %c0_i32_0 : i32
    scf.if %2 {
      %cst_22 = arith.constant 0.000000e+00 : f32
      %60 = vector.broadcast %cst_22 : f32 to vector<16x256xf32>
      %c0_23 = arith.constant 0 : index
      %c0_24 = arith.constant 0 : index
      %61 = vector.load %arg6[%c0_23, %c0_24] : memref<16x256xf32, #tpu.memory_space<vmem>>, vector<16x256xf32>
      tpu.vector_store %arg6[%c0_23, %c0_24], %60 {strides = array<i32>} : memref<16x256xf32, #tpu.memory_space<vmem>>, vector<16x256xf32>,
    } else {
    }
    %c0 = arith.constant 0 : index
    %c0_1 = arith.constant 0 : index
    %3 = vector.load %arg3[%c0, %c0_1] : memref<128x96xbf16, #tpu.memory_space<vmem>>, vector<128x96xbf16>
    %c0_2 = arith.constant 0 : index
    %c0_3 = arith.constant 0 : index
    %4 = vector.load %arg4[%c0_2, %c0_3] : memref<96x256xbf16, #tpu.memory_space<vmem>>, vector<96x256xbf16>
    %cst = arith.constant dense<0.000000e+00> : vector<128x256xf32>
    %5 = tpu.matmul %3, %4, %cst {dimension_numbers = #tpu.dot_dimension_numbers<[1], [0], [0], [1], [0, 0, 1, 1], [], []>} : vector<128x96xbf16>, vector<96x256xbf16>, vector<128x256xf32> -> vector<128x256xf32>
    %6 = vector.extract_strided_slice %5 {offsets = [0, 0], sizes = [128, 128], strides = [1, 1]} : vector<128x256xf32> to vector<128x128xf32>
    %7 = vector.extract_strided_slice %6 {offsets = [0, 100], sizes = [128, 1], strides = [1, 1]} : vector<128x128xf32> to vector<128x1xf32>
    %cst_4 = arith.constant 0.000000e+00 : f32
    %8 = vector.broadcast %cst_4 : f32 to vector<128x1xf32>
    %9 = arith.cmpf ogt, %7, %8 : vector<128x1xf32>
    %cst_5 = arith.constant 2.000000e-01 : f32
    %10 = vector.broadcast %cst_5 : f32 to vector<128x1xf32>
    %11 = arith.mulf %10, %7 : vector<128x1xf32>
    %12 = arith.select %9, %7, %11 : vector<128x1xi1>, vector<128x1xf32>
    %cst_6 = arith.constant 0.000000e+00 : f32
    %13 = vector.broadcast %cst_6 : f32 to vector<128x1xf32>
    %14 = arith.subf %13, %12 : vector<128x1xf32>
    %15 = math.exp %14 : vector<128x1xf32>
    %16 = tpu.iota {dimensions = array<i32: 1>} : vector<128x128xi32>
    %c100_i32 = arith.constant 100 : i32
    %17 = vector.broadcast %c100_i32 : i32 to vector<128x128xi32>
    %18 = arith.cmpi eq, %16, %17 : vector<128x128xi32>
    %cst_7 = arith.constant 1.000000e+00 : f32
    %19 = vector.broadcast %cst_7 : f32 to vector<128x128xf32>
    %20 = arith.select %18, %19, %6 : vector<128x128xi1>, vector<128x128xf32>
    %21 = vector.broadcast %15 : vector<128x1xf32> to vector<128x128xf32>
    %22 = arith.mulf %20, %21 : vector<128x128xf32>
    %23 = arith.truncf %22 : vector<128x128xf32> to vector<128x128xbf16>
    %24 = vector.extract_strided_slice %5 {offsets = [0, 128], sizes = [128, 128], strides = [1, 1]} : vector<128x256xf32> to vector<128x128xf32>
    %25 = vector.extract_strided_slice %24 {offsets = [0, 100], sizes = [128, 1], strides = [1, 1]} : vector<128x128xf32> to vector<128x1xf32>
    %cst_8 = arith.constant 0.000000e+00 : f32
    %26 = vector.broadcast %cst_8 : f32 to vector<128x1xf32>
    %27 = arith.cmpf ogt, %25, %26 : vector<128x1xf32>
    %cst_9 = arith.constant 2.000000e-01 : f32
    %28 = vector.broadcast %cst_9 : f32 to vector<128x1xf32>
    %29 = arith.mulf %28, %25 : vector<128x1xf32>
    %30 = arith.select %27, %25, %29 : vector<128x1xi1>, vector<128x1xf32>
    %cst_10 = arith.constant 0.000000e+00 : f32
    %31 = vector.broadcast %cst_10 : f32 to vector<128x1xf32>
    %32 = arith.subf %31, %30 : vector<128x1xf32>
    %33 = math.exp %32 : vector<128x1xf32>
    %34 = tpu.iota {dimensions = array<i32: 1>} : vector<128x128xi32>
    %c100_i32_11 = arith.constant 100 : i32
    %35 = vector.broadcast %c100_i32_11 : i32 to vector<128x128xi32>
    %36 = arith.cmpi eq, %34, %35 : vector<128x128xi32>
    %cst_12 = arith.constant 1.000000e+00 : f32
    %37 = vector.broadcast %cst_12 : f32 to vector<128x128xf32>
    %38 = arith.select %36, %37, %24 : vector<128x128xi1>, vector<128x128xf32>
    %39 = vector.broadcast %33 : vector<128x1xf32> to vector<128x128xf32>
    %40 = arith.mulf %38, %39 : vector<128x128xf32>
    %41 = arith.truncf %40 : vector<128x128xf32> to vector<128x128xbf16>
    %42 = tpu.concatenate %23, %41 in 1 : vector<128x128xbf16>, vector<128x128xbf16> -> vector<128x256xbf16>
    %c0_13 = arith.constant 0 : index
    %c0_14 = arith.constant 0 : index
    %43 = vector.load %arg2[%c0_13, %c0_14] : memref<1x128xi32, #tpu.memory_space<vmem>>, vector<1x128xi32>
    %44 = tpu.iota {dimensions = array<i32: 0>} : vector<16x128xi32>
    %c16_i32 = arith.constant 16 : i32
    %45 = arith.muli %arg0, %c16_i32 : i32
    %46 = vector.broadcast %45 : i32 to vector<16x128xi32>
    %47 = arith.addi %44, %46 : vector<16x128xi32>
    %48 = vector.broadcast %43 : vector<1x128xi32> to vector<16x128xi32>
    %49 = arith.cmpi eq, %47, %48 : vector<16x128xi32>
    %50 = arith.extui %49 : vector<16x128xi1> to vector<16x128xi32>
    %51 = arith.sitofp %50 : vector<16x128xi32> to vector<16x128xf32>
    %52 = arith.truncf %51 : vector<16x128xf32> to vector<16x128xbf16>
    %c0_15 = arith.constant 0 : index
    %c0_16 = arith.constant 0 : index
    %53 = vector.load %arg6[%c0_15, %c0_16] : memref<16x256xf32, #tpu.memory_space<vmem>>, vector<16x256xf32>
    %cst_17 = arith.constant dense<0.000000e+00> : vector<16x256xf32>
    %54 = tpu.matmul %52, %42, %cst_17 {dimension_numbers = #tpu.dot_dimension_numbers<[1], [0], [0], [1], [0, 0, 1, 1], [], []>} : vector<16x128xbf16>, vector<128x256xbf16>, vector<16x256xf32> -> vector<16x256xf32>
    %55 = arith.addf %53, %54 : vector<16x256xf32>
    %c0_18 = arith.constant 0 : index
    %c0_19 = arith.constant 0 : index
    %56 = vector.load %arg6[%c0_18, %c0_19] : memref<16x256xf32, #tpu.memory_space<vmem>>, vector<16x256xf32>
    tpu.vector_store %arg6[%c0_18, %c0_19], %55 {strides = array<i32>} : memref<16x256xf32, #tpu.memory_space<vmem>>, vector<16x256xf32>,
    %c0_i32_20 = arith.constant 0 : i32
    %57 = arith.cmpi eq, %arg1, %c0_i32_20 : i32
    %58 = arith.extui %57 : i1 to i32
    %c0_i32_21 = arith.constant 0 : i32
    %59 = arith.cmpi ne, %58, %c0_i32_21 : i32
    scf.if %59 {
      %c0_22 = arith.constant 0 : index
      %c0_23 = arith.constant 0 : index
      %60 = vector.load %arg6[%c0_22, %c0_23] : memref<16x256xf32, #tpu.memory_space<vmem>>, vector<16x256xf32>
      %61 = vector.extract_strided_slice %60 {offsets = [0, 0], sizes = [16, 128], strides = [1, 1]} : vector<16x256xf32> to vector<16x128xf32>
      %62 = vector.extract_strided_slice %61 {offsets = [0, 100], sizes = [16, 1], strides = [1, 1]} : vector<16x128xf32> to vector<16x1xf32>
      %cst_24 = arith.constant 9.99999996E-13 : f32
      %63 = vector.broadcast %cst_24 : f32 to vector<16x1xf32>
      %64 = arith.maximumf %62, %63 : vector<16x1xf32>
      %65 = vector.extract_strided_slice %61 {offsets = [0, 0], sizes = [16, 100], strides = [1, 1]} : vector<16x128xf32> to vector<16x100xf32>
      %66 = tpu.reciprocal %64 {approx = true} : vector<16x1xf32> -> vector<16x1xf32>
      %67 = vector.broadcast %66 : vector<16x1xf32> to vector<16x100xf32>
      %68 = arith.mulf %65, %67 : vector<16x100xf32>
      %cst_25 = arith.constant 0.000000e+00 : f32
      %69 = vector.broadcast %cst_25 : f32 to vector<16x100xf32>
      %70 = arith.cmpf ogt, %68, %69 : vector<16x100xf32>
      %71 = math.exp %68 : vector<16x100xf32>
      %cst_26 = arith.constant 1.000000e+00 : f32
      %72 = vector.broadcast %cst_26 : f32 to vector<16x100xf32>
      %73 = arith.subf %71, %72 : vector<16x100xf32>
      %74 = arith.select %70, %68, %73 : vector<16x100xi1>, vector<16x100xf32>
      %75 = vector.extract_strided_slice %60 {offsets = [0, 128], sizes = [16, 128], strides = [1, 1]} : vector<16x256xf32> to vector<16x128xf32>
      %76 = vector.extract_strided_slice %75 {offsets = [0, 100], sizes = [16, 1], strides = [1, 1]} : vector<16x128xf32> to vector<16x1xf32>
      %cst_27 = arith.constant 9.99999996E-13 : f32
      %77 = vector.broadcast %cst_27 : f32 to vector<16x1xf32>
      %78 = arith.maximumf %76, %77 : vector<16x1xf32>
      %79 = vector.extract_strided_slice %75 {offsets = [0, 0], sizes = [16, 100], strides = [1, 1]} : vector<16x128xf32> to vector<16x100xf32>
      %80 = tpu.reciprocal %78 {approx = true} : vector<16x1xf32> -> vector<16x1xf32>
      %81 = vector.broadcast %80 : vector<16x1xf32> to vector<16x100xf32>
      %82 = arith.mulf %79, %81 : vector<16x100xf32>
      %cst_28 = arith.constant 0.000000e+00 : f32
      %83 = vector.broadcast %cst_28 : f32 to vector<16x100xf32>
      %84 = arith.cmpf ogt, %82, %83 : vector<16x100xf32>
      %85 = math.exp %82 : vector<16x100xf32>
      %cst_29 = arith.constant 1.000000e+00 : f32
      %86 = vector.broadcast %cst_29 : f32 to vector<16x100xf32>
      %87 = arith.subf %85, %86 : vector<16x100xf32>
      %88 = arith.select %84, %82, %87 : vector<16x100xi1>, vector<16x100xf32>
      %89 = tpu.concatenate %74, %88 in 1 : vector<16x100xf32>, vector<16x100xf32> -> vector<16x200xf32>
      %c0_30 = arith.constant 0 : index
      %c0_31 = arith.constant 0 : index
      %90 = vector.load %arg5[%c0_30, %c0_31] : memref<16x200xf32, #tpu.memory_space<vmem>>, vector<16x200xf32>
      tpu.vector_store %arg5[%c0_30, %c0_31], %89 {strides = array<i32>} : memref<16x200xf32, #tpu.memory_space<vmem>>, vector<16x200xf32>,
    } else {
    }
    return
  }
  func.func @transform_0(%arg0: i32, %arg1: i32) -> (i32, i32) {
    %c0_i32 = arith.constant 0 : i32
    %c0_i32_0 = arith.constant 0 : i32
    return %c0_i32, %arg1 : i32, i32
  }
  func.func @transform_1(%arg0: i32, %arg1: i32) -> (i32, i32) {
    %c0_i32 = arith.constant 0 : i32
    %c0_i32_0 = arith.constant 0 : i32
    return %arg1, %c0_i32 : i32, i32
  }
  func.func @transform_2(%arg0: i32, %arg1: i32) -> (i32, i32) {
    %c0_i32 = arith.constant 0 : i32
    %c0_i32_0 = arith.constant 0 : i32
    %c0_i32_1 = arith.constant 0 : i32
    return %c0_i32, %c0_i32_0 : i32, i32
  }
  func.func @transform_3(%arg0: i32, %arg1: i32) -> (i32, i32) {
    %c0_i32 = arith.constant 0 : i32
    %c0_i32_0 = arith.constant 0 : i32
    return %arg0, %c0_i32 : i32, i32
  }
}

</mosaic_0001>

<llo_original>
// kernel: tpu_custom_call.1
$region0: #{tpu_custom_call.1}
  #allocation0 [shape = 'u32[]', space=smem, size = 0x4, offset = 0x4, fixed_abs, tag = 'smem constant byte address 0x4 - core index']
  #allocation1 [shape = 'u32[144,128]{1,0:T(1,128)}', space=vmem, size = 0x12000, scoped, tag = 'internal scratch']
  #allocation2 [shape = 'f32[16,256]{1,0:T(8,128)}', space=vmem, size = 0x4000, scoped, tag = 'scratch operand']
  %s0 = inlined_call_operand.vmem [shape: s32[1,128], index: 0, kind: input, shape index: {}]
  %s1 = inlined_call_operand.vmem [shape: bf16[128,96], index: 1, kind: input, shape index: {}]
  %s2 = inlined_call_operand.vmem [shape: bf16[96,256], index: 2, kind: input, shape index: {}]
  %s3 = inlined_call_operand.hbm [shape: f32[16,200], index: 3, kind: output, shape index: {}]
  %s4 = sld [smem:[#allocation0]]
  $region30: #{tpu_custom_call.1} parent=0
    _
  %s6 = ssub.s32 1, %s4
  %s7 = scalar_select 0, %s6, %s4
  $region1: #{tpu_custom_call.1} parent=0
    #allocation3 [shape = 'u8[16384]{0}', space=vmem, size = 0x4000, scoped, tag = 'output window, operand 0, single buffered']
    #allocation4 [shape = 's32[1]{0}', space=sflag, size = 0x4, scoped, tag = 'scoped memory for tpu_custom_call.1']
    %8 = vsyncpa [#allocation4], 0
    // Predicated region
    $region2: #{tpu_custom_call.1} parent=1 // pred_check
      _
    $region3: #{tpu_custom_call.1} parent=1 // pred_check_branch
      %10 = sbr.rel (0) target = $region5
    $region4: #{tpu_custom_call.1} parent=1 // pred_region
      _
    $region5: #{tpu_custom_call.1} parent=1 // pred_fallthru
      _
    // Predicated region
    $region6: #{tpu_custom_call.1} parent=1 // pred_check
      _
    $region7: #{tpu_custom_call.1} parent=1 // pred_check_branch
      %12 = sbr.rel (0) target = $region9
    $region8: #{tpu_custom_call.1} parent=1 // pred_region
      _
    $region9: #{tpu_custom_call.1} parent=1 // pred_fallthru
      _
    // Predicated region
    $region10: #{tpu_custom_call.1} parent=1 // pred_check
      _
    $region11: #{tpu_custom_call.1} parent=1 // pred_check_branch
      %14 = sbr.rel (0) target = $region13
    $region12: #{tpu_custom_call.1} parent=1 // pred_region
      _
    $region13: #{tpu_custom_call.1} parent=1 // pred_fallthru
      _
    %p16 = scmp.eq.s32.totalorder 0, 0
    // Predicated region
    $region14: #{tpu_custom_call.1} parent=1 // pred_check
      %p17 = pneg %p16
    $region15: #{tpu_custom_call.1} parent=1 // pred_check_branch
      %19 = sbr.rel (%p17) target = $region17
    $region16: #{tpu_custom_call.1} parent=1 // pred_region
      %20 = vst [vmem:[#allocation2] sm:$0xff] 0.0
      %21 = vst [vmem:[#allocation2 + $0x8] sm:$0xff] 0.0
      %22 = vst [vmem:[#allocation2 + $0x10] sm:$0xff] 0.0
      %23 = vst [vmem:[#allocation2 + $0x18] sm:$0xff] 0.0
    $region17: #{tpu_custom_call.1} parent=1 // pred_fallthru
      _
    %v24 = vld [vmem:[%s1] sm:$0xf]
    %v25 = vld [vmem:[%s1 + $0x4] sm:$0xf]
    %v26 = vld [vmem:[%s1 + $0x8] sm:$0xf]
    %v27 = vld [vmem:[%s1 + $0xc] sm:$0xf]
    %v28 = vld [vmem:[%s1 + $0x10] sm:$0xf]
    %v29 = vld [vmem:[%s1 + $0x14] sm:$0xf]
    %v30 = vld [vmem:[%s1 + $0x18] sm:$0xf]
    %v31 = vld [vmem:[%s1 + $0x1c] sm:$0xf]
    %v32 = vld [vmem:[%s1 + $0x20] sm:$0xf]
    %v33 = vld [vmem:[%s1 + $0x24] sm:$0xf]
    %v34 = vld [vmem:[%s1 + $0x28] sm:$0xf]
    %v35 = vld [vmem:[%s1 + $0x2c] sm:$0xf]
    %v36 = vld [vmem:[%s1 + $0x30] sm:$0xf]
    %v37 = vld [vmem:[%s1 + $0x34] sm:$0xf]
    %v38 = vld [vmem:[%s1 + $0x38] sm:$0xf]
    %v39 = vld [vmem:[%s1 + $0x3c] sm:$0xf]
    %v40 = vld [vmem:[%s2] sm:$0xff]
    %v41 = vld [vmem:[%s2 + $0x8] sm:$0xff]
    %v42 = vld [vmem:[%s2 + $0x10] sm:$0xff]
    %v43 = vld [vmem:[%s2 + $0x18] sm:$0xff]
    %v44 = vld [vmem:[%s2 + $0x20] sm:$0xff]
    %v45 = vld [vmem:[%s2 + $0x28] sm:$0xff]
    %v46 = vld [vmem:[%s2 + $0x30] sm:$0xff]
    %v47 = vld [vmem:[%s2 + $0x38] sm:$0xff]
    %v48 = vld [vmem:[%s2 + $0x40] sm:$0xff]
    %v49 = vld [vmem:[%s2 + $0x48] sm:$0xff]
    %v50 = vld [vmem:[%s2 + $0x50] sm:$0xff]
    %v51 = vld [vmem:[%s2 + $0x58] sm:$0xff]
    %v68 = vunpack.c.l.b16 %v24
    %v69 = vunpack.c.l.b16 %v25
    %v70 = vunpack.c.l.b16 %v26
    %v71 = vunpack.c.l.b16 %v27
    %v72 = vunpack.c.l.b16 %v28
    %v73 = vunpack.c.l.b16 %v29
    %v74 = vunpack.c.l.b16 %v30
    %v75 = vunpack.c.l.b16 %v31
    %v76 = vunpack.c.l.b16 %v32
    %v77 = vunpack.c.l.b16 %v33
    %v78 = vunpack.c.l.b16 %v34
    %v79 = vunpack.c.l.b16 %v35
    %v80 = vunpack.c.l.b16 %v36
    %v81 = vunpack.c.l.b16 %v37
    %v82 = vunpack.c.l.b16 %v38
    %v83 = vunpack.c.l.b16 %v39
    %v84 = vpack.c.b16 %v69, %v68
    %v85 = vpack.c.b16 %v71, %v70
    %v86 = vpack.c.b16 %v73, %v72
    %v87 = vpack.c.b16 %v75, %v74
    %v88 = vpack.c.b16 %v77, %v76
    %v89 = vpack.c.b16 %v79, %v78
    %v90 = vpack.c.b16 %v81, %v80
    %v91 = vpack.c.b16 %v83, %v82
    %v104 = vunpack.c.l.b16 %v40
    %v105 = vunpack.c.h.b16 %v40
    %v106 = vunpack.c.l.b16 %v41
    %v107 = vunpack.c.h.b16 %v41
    %v108 = vunpack.c.l.b16 %v42
    %v109 = vunpack.c.h.b16 %v42
    %v110 = vunpack.c.l.b16 %v43
    %v111 = vunpack.c.h.b16 %v43
    %v112 = vunpack.c.l.b16 %v44
    %v113 = vunpack.c.h.b16 %v44
    %v114 = vunpack.c.l.b16 %v45
    %v115 = vunpack.c.h.b16 %v45
    %v116 = vunpack.c.l.b16 %v46
    %v117 = vunpack.c.h.b16 %v46
    %v118 = vunpack.c.l.b16 %v47
    %v119 = vunpack.c.h.b16 %v47
    %v120 = vunpack.c.l.b16 %v48
    %v121 = vunpack.c.h.b16 %v48
    %v122 = vunpack.c.l.b16 %v49
    %v123 = vunpack.c.h.b16 %v49
    %v124 = vunpack.c.l.b16 %v50
    %v125 = vunpack.c.h.b16 %v50
    %v126 = vunpack.c.l.b16 %v51
    %v127 = vunpack.c.h.b16 %v51
    %v128 = vpack.c.b16 %v106, %v104
    %v129 = vpack.c.b16 %v107, %v105
    %v130 = vpack.c.b16 %v110, %v108
    %v131 = vpack.c.b16 %v111, %v109
    %v132 = vpack.c.b16 %v114, %v112
    %v133 = vpack.c.b16 %v115, %v113
    %v134 = vpack.c.b16 %v118, %v116
    %v135 = vpack.c.b16 %v119, %v117
    %v136 = vpack.c.b16 %v122, %v120
    %v137 = vpack.c.b16 %v123, %v121
    %v138 = vpack.c.b16 %v126, %v124
    %v139 = vpack.c.b16 %v127, %v125
    %vm152 = vcmask 785408
    %v154 = vsel %vm152, %v84, 0
    %v157 = vsel %vm152, %v85, 0
    %v160 = vsel %vm152, %v86, 0
    %v163 = vsel %vm152, %v87, 0
    %v166 = vsel %vm152, %v88, 0
    %v169 = vsel %vm152, %v89, 0
    %v172 = vsel %vm152, %v90, 0
    %v175 = vsel %vm152, %v91, 0
    %177 = vmatprep.subr.bf16.mxu0 0
    %178 = vmatpush1.bf16.msra.mxu0 0
    %179 = vmatprep.subr.bf16.mxu0 0
    %180 = vmatpush1.bf16.msra.mxu0 0
    %181 = vmatprep.subr.bf16.mxu0 %v139
    %182 = vmatpush1.bf16.msra.mxu0 %v138
    %183 = vmatprep.subr.bf16.mxu0 %v137
    %184 = vmatpush1.bf16.msra.mxu0 %v136
    %185 = vmatprep.subr.bf16.mxu0 %v135
    %186 = vmatpush1.bf16.msra.mxu0 %v134
    %187 = vmatprep.subr.bf16.mxu0 %v133
    %188 = vmatpush1.bf16.msra.mxu0 %v132
    %189 = vmatprep.subr.bf16.mxu0 %v131
    %190 = vmatpush1.bf16.msra.mxu0 %v130
    %191 = vmatprep.subr.bf16.mxu0 %v129
    %192 = vmatpush1.bf16.msra.mxu0 %v128
    %193 = vmatprep.subr.bf16.mxu0 0
    %194 = vmatpush2.bf16.msra.mxu0 0
    %195 = vmatprep.subr.bf16.mxu0 0
    %196 = vmatpush2.bf16.msra.mxu0 0
    %197 = vmatprep.subr.bf16.mxu0 0
    %198 = vmatpush2.bf16.msra.mxu0 0
    %199 = vmatprep.subr.bf16.mxu0 0
    %200 = vmatpush2.bf16.msra.mxu0 0
    %201 = vmatprep.subr.bf16.mxu0 0
    %202 = vmatpush2.bf16.msra.mxu0 0
    %203 = vmatprep.subr.bf16.mxu0 0
    %204 = vmatpush2.bf16.msra.mxu0 0
    %205 = vmatprep.subr.bf16.mxu0 0
    %206 = vmatpush2.bf16.msra.mxu0 0
    %207 = vmatprep.subr.bf16.mxu0 0
    %208 = vmatpush2.bf16.msra.mxu0 0
    %209 = vmatprep.mubr.bf16.mxu0 0
    %210 = vmatmul.mubr.bf16.gmra.mxu0 %v154
    %v211 = vpop.f32.mrf.mxu0
    %v212 = vadd.f32 0.0, %v211
    %v213 = vpop.f32.mrf.mxu0
    %v214 = vadd.f32 0.0, %v213
    %v215 = vpop.f32.mrf.mxu0
    %v216 = vadd.f32 0.0, %v215
    %v217 = vpop.f32.mrf.mxu0
    %v218 = vadd.f32 0.0, %v217
    %219 = vmatprep.mubr.bf16.mxu0 0
    %220 = vmatmul.mubr.bf16.gmra.mxu0 %v157
    %v221 = vpop.f32.mrf.mxu0
    %v222 = vadd.f32 0.0, %v221
    %v223 = vpop.f32.mrf.mxu0
    %v224 = vadd.f32 0.0, %v223
    %v225 = vpop.f32.mrf.mxu0
    %v226 = vadd.f32 0.0, %v225
    %v227 = vpop.f32.mrf.mxu0
    %v228 = vadd.f32 0.0, %v227
    %229 = vmatprep.mubr.bf16.mxu0 0
    %230 = vmatmul.mubr.bf16.gmra.mxu0 %v160
    %v231 = vpop.f32.mrf.mxu0
    %v232 = vadd.f32 0.0, %v231
    %v233 = vpop.f32.mrf.mxu0
    %v234 = vadd.f32 0.0, %v233
    %v235 = vpop.f32.mrf.mxu0
    %v236 = vadd.f32 0.0, %v235
    %v237 = vpop.f32.mrf.mxu0
    %v238 = vadd.f32 0.0, %v237
    %239 = vmatprep.mubr.bf16.mxu0 0
    %240 = vmatmul.mubr.bf16.gmra.mxu0 %v163
    %v241 = vpop.f32.mrf.mxu0
    %v242 = vadd.f32 0.0, %v241
    %v243 = vpop.f32.mrf.mxu0
    %v244 = vadd.f32 0.0, %v243
    %v245 = vpop.f32.mrf.mxu0
    %v246 = vadd.f32 0.0, %v245
    %v247 = vpop.f32.mrf.mxu0
    %v248 = vadd.f32 0.0, %v247
    %249 = vmatprep.mubr.bf16.mxu0 0
    %250 = vmatmul.mubr.bf16.gmra.mxu0 %v166
    %v251 = vpop.f32.mrf.mxu0
    %v252 = vadd.f32 0.0, %v251
    %v253 = vpop.f32.mrf.mxu0
    %v254 = vadd.f32 0.0, %v253
    %v255 = vpop.f32.mrf.mxu0
    %v256 = vadd.f32 0.0, %v255
    %v257 = vpop.f32.mrf.mxu0
    %v258 = vadd.f32 0.0, %v257
    %259 = vmatprep.mubr.bf16.mxu0 0
    %260 = vmatmul.mubr.bf16.gmra.mxu0 %v169
    %v261 = vpop.f32.mrf.mxu0
    %v262 = vadd.f32 0.0, %v261
    %v263 = vpop.f32.mrf.mxu0
    %v264 = vadd.f32 0.0, %v263
    %v265 = vpop.f32.mrf.mxu0
    %v266 = vadd.f32 0.0, %v265
    %v267 = vpop.f32.mrf.mxu0
    %v268 = vadd.f32 0.0, %v267
    %269 = vmatprep.mubr.bf16.mxu0 0
    %270 = vmatmul.mubr.bf16.gmra.mxu0 %v172
    %v271 = vpop.f32.mrf.mxu0
    %v272 = vadd.f32 0.0, %v271
    %v273 = vpop.f32.mrf.mxu0
    %v274 = vadd.f32 0.0, %v273
    %v275 = vpop.f32.mrf.mxu0
    %v276 = vadd.f32 0.0, %v275
    %v277 = vpop.f32.mrf.mxu0
    %v278 = vadd.f32 0.0, %v277
    %279 = vmatprep.mubr.bf16.mxu0 0
    %280 = vmatmul.mubr.bf16.gmra.mxu0 %v175
    %v281 = vpop.f32.mrf.mxu0
    %v282 = vadd.f32 0.0, %v281
    %v283 = vpop.f32.mrf.mxu0
    %v284 = vadd.f32 0.0, %v283
    %v285 = vpop.f32.mrf.mxu0
    %v286 = vadd.f32 0.0, %v285
    %v287 = vpop.f32.mrf.mxu0
    %v288 = vadd.f32 0.0, %v287
    %289 = vdwg.mxu0
    %vm290 = vcmp.gt.f32.partialorder %v212, 0.0
    %vm291 = vcmp.gt.f32.partialorder %v216, 0.0
    %vm292 = vcmp.gt.f32.partialorder %v222, 0.0
    %vm293 = vcmp.gt.f32.partialorder %v226, 0.0
    %vm294 = vcmp.gt.f32.partialorder %v232, 0.0
    %vm295 = vcmp.gt.f32.partialorder %v236, 0.0
    %vm296 = vcmp.gt.f32.partialorder %v242, 0.0
    %vm297 = vcmp.gt.f32.partialorder %v246, 0.0
    %vm298 = vcmp.gt.f32.partialorder %v252, 0.0
    %vm299 = vcmp.gt.f32.partialorder %v256, 0.0
    %vm300 = vcmp.gt.f32.partialorder %v262, 0.0
    %vm301 = vcmp.gt.f32.partialorder %v266, 0.0
    %vm302 = vcmp.gt.f32.partialorder %v272, 0.0
    %vm303 = vcmp.gt.f32.partialorder %v276, 0.0
    %vm304 = vcmp.gt.f32.partialorder %v282, 0.0
    %vm305 = vcmp.gt.f32.partialorder %v286, 0.0
    %v306 = vmul.f32 %v212, 0.2
    %v307 = vmul.f32 %v216, 0.2
    %v308 = vmul.f32 %v222, 0.2
    %v309 = vmul.f32 %v226, 0.2
    %v310 = vmul.f32 %v232, 0.2
    %v311 = vmul.f32 %v236, 0.2
    %v312 = vmul.f32 %v242, 0.2
    %v313 = vmul.f32 %v246, 0.2
    %v314 = vmul.f32 %v252, 0.2
    %v315 = vmul.f32 %v256, 0.2
    %v316 = vmul.f32 %v262, 0.2
    %v317 = vmul.f32 %v266, 0.2
    %v318 = vmul.f32 %v272, 0.2
    %v319 = vmul.f32 %v276, 0.2
    %v320 = vmul.f32 %v282, 0.2
    %v321 = vmul.f32 %v286, 0.2
    %v322 = vsel %vm290, %v212, %v306
    %v323 = vsel %vm291, %v216, %v307
    %v324 = vsel %vm292, %v222, %v308
    %v325 = vsel %vm293, %v226, %v309
    %v326 = vsel %vm294, %v232, %v310
    %v327 = vsel %vm295, %v236, %v311
    %v328 = vsel %vm296, %v242, %v312
    %v329 = vsel %vm297, %v246, %v313
    %v330 = vsel %vm298, %v252, %v314
    %v331 = vsel %vm299, %v256, %v315
    %v332 = vsel %vm300, %v262, %v316
    %v333 = vsel %vm301, %v266, %v317
    %v334 = vsel %vm302, %v272, %v318
    %v335 = vsel %vm303, %v276, %v319
    %v336 = vsel %vm304, %v282, %v320
    %v337 = vsel %vm305, %v286, %v321
    %v338 = vsub.f32 0.0, %v322
    %v339 = vsub.f32 0.0, %v323
    %v340 = vsub.f32 0.0, %v324
    %v341 = vsub.f32 0.0, %v325
    %v342 = vsub.f32 0.0, %v326
    %v343 = vsub.f32 0.0, %v327
    %v344 = vsub.f32 0.0, %v328
    %v345 = vsub.f32 0.0, %v329
    %v346 = vsub.f32 0.0, %v330
    %v347 = vsub.f32 0.0, %v331
    %v348 = vsub.f32 0.0, %v332
    %v349 = vsub.f32 0.0, %v333
    %v350 = vsub.f32 0.0, %v334
    %v351 = vsub.f32 0.0, %v335
    %v352 = vsub.f32 0.0, %v336
    %v353 = vsub.f32 0.0, %v337
    %v354 = vmul.f32 %v338, 1.442695
    %v355 = vpow.pop %v354
    %v356 = vmul.f32 %v339, 1.442695
    %v357 = vpow.pop %v356
    %v358 = vmul.f32 %v340, 1.442695
    %v359 = vpow.pop %v358
    %v360 = vmul.f32 %v341, 1.442695
    %v361 = vpow.pop %v360
    %v362 = vmul.f32 %v342, 1.442695
    %v363 = vpow.pop %v362
    %v364 = vmul.f32 %v343, 1.442695
    %v365 = vpow.pop %v364
    %v366 = vmul.f32 %v344, 1.442695
    %v367 = vpow.pop %v366
    %v368 = vmul.f32 %v345, 1.442695
    %v369 = vpow.pop %v368
    %v370 = vmul.f32 %v346, 1.442695
    %v371 = vpow.pop %v370
    %v372 = vmul.f32 %v347, 1.442695
    %v373 = vpow.pop %v372
    %v374 = vmul.f32 %v348, 1.442695
    %v375 = vpow.pop %v374
    %v376 = vmul.f32 %v349, 1.442695
    %v377 = vpow.pop %v376
    %v378 = vmul.f32 %v350, 1.442695
    %v379 = vpow.pop %v378
    %v380 = vmul.f32 %v351, 1.442695
    %v381 = vpow.pop %v380
    %v382 = vmul.f32 %v352, 1.442695
    %v383 = vpow.pop %v382
    %v384 = vmul.f32 %v353, 1.442695
    %v385 = vpow.pop %v384
    %v386 = vlaneseq
    %v387 = vand.u32 %v386, 127
    %vm388 = vcmp.eq.s32.totalorder %v387, 100
    %v389 = vsel %vm388, 1.0, %v212
    %v390 = vsel %vm388, 1.0, %v216
    %v391 = vsel %vm388, 1.0, %v222
    %v392 = vsel %vm388, 1.0, %v226
    %v393 = vsel %vm388, 1.0, %v232
    %v394 = vsel %vm388, 1.0, %v236
    %v395 = vsel %vm388, 1.0, %v242
    %v396 = vsel %vm388, 1.0, %v246
    %v397 = vsel %vm388, 1.0, %v252
    %v398 = vsel %vm388, 1.0, %v256
    %v399 = vsel %vm388, 1.0, %v262
    %v400 = vsel %vm388, 1.0, %v266
    %v401 = vsel %vm388, 1.0, %v272
    %v402 = vsel %vm388, 1.0, %v276
    %v403 = vsel %vm388, 1.0, %v282
    %v404 = vsel %vm388, 1.0, %v286
    %406 = vset.pattern.permute.xlu0 100
    %407 = vperm.xlu0 %406, %v355
    %v408 = vpop.permute.xlu0 %407
    %411 = vset.pattern.permute.xlu0 100
    %412 = vperm.xlu0 %411, %v357
    %v413 = vpop.permute.xlu0 %412
    %416 = vset.pattern.permute.xlu0 100
    %417 = vperm.xlu0 %416, %v359
    %v418 = vpop.permute.xlu0 %417
    %421 = vset.pattern.permute.xlu0 100
    %422 = vperm.xlu0 %421, %v361
    %v423 = vpop.permute.xlu0 %422
    %426 = vset.pattern.permute.xlu0 100
    %427 = vperm.xlu0 %426, %v363
    %v428 = vpop.permute.xlu0 %427
    %431 = vset.pattern.permute.xlu0 100
    %432 = vperm.xlu0 %431, %v365
    %v433 = vpop.permute.xlu0 %432
    %436 = vset.pattern.permute.xlu0 100
    %437 = vperm.xlu0 %436, %v367
    %v438 = vpop.permute.xlu0 %437
    %441 = vset.pattern.permute.xlu0 100
    %442 = vperm.xlu0 %441, %v369
    %v443 = vpop.permute.xlu0 %442
    %446 = vset.pattern.permute.xlu0 100
    %447 = vperm.xlu0 %446, %v371
    %v448 = vpop.permute.xlu0 %447
    %451 = vset.pattern.permute.xlu0 100
    %452 = vperm.xlu0 %451, %v373
    %v453 = vpop.permute.xlu0 %452
    %456 = vset.pattern.permute.xlu0 100
    %457 = vperm.xlu0 %456, %v375
    %v458 = vpop.permute.xlu0 %457
    %461 = vset.pattern.permute.xlu0 100
    %462 = vperm.xlu0 %461, %v377
    %v463 = vpop.permute.xlu0 %462
    %466 = vset.pattern.permute.xlu0 100
    %467 = vperm.xlu0 %466, %v379
    %v468 = vpop.permute.xlu0 %467
    %471 = vset.pattern.permute.xlu0 100
    %472 = vperm.xlu0 %471, %v381
    %v473 = vpop.permute.xlu0 %472
    %476 = vset.pattern.permute.xlu0 100
    %477 = vperm.xlu0 %476, %v383
    %v478 = vpop.permute.xlu0 %477
    %481 = vset.pattern.permute.xlu0 100
    %482 = vperm.xlu0 %481, %v385
    %v483 = vpop.permute.xlu0 %482
    %v485 = vmul.f32 %v389, %v408
    %v486 = vmul.f32 %v390, %v413
    %v487 = vmul.f32 %v391, %v418
    %v488 = vmul.f32 %v392, %v423
    %v489 = vmul.f32 %v393, %v428
    %v490 = vmul.f32 %v394, %v433
    %v491 = vmul.f32 %v395, %v438
    %v492 = vmul.f32 %v396, %v443
    %v493 = vmul.f32 %v397, %v448
    %v494 = vmul.f32 %v398, %v453
    %v495 = vmul.f32 %v399, %v458
    %v496 = vmul.f32 %v400, %v463
    %v497 = vmul.f32 %v401, %v468
    %v498 = vmul.f32 %v402, %v473
    %v499 = vmul.f32 %v403, %v478
    %v500 = vmul.f32 %v404, %v483
    %v501 = vpack.c.bf16 %v486, %v485
    %v502 = vpack.c.bf16 %v488, %v487
    %v503 = vpack.c.bf16 %v490, %v489
    %v504 = vpack.c.bf16 %v492, %v491
    %v505 = vpack.c.bf16 %v494, %v493
    %v506 = vpack.c.bf16 %v496, %v495
    %v507 = vpack.c.bf16 %v498, %v497
    %v508 = vpack.c.bf16 %v500, %v499
    %vm509 = vcmp.gt.f32.partialorder %v214, 0.0
    %vm510 = vcmp.gt.f32.partialorder %v218, 0.0
    %vm511 = vcmp.gt.f32.partialorder %v224, 0.0
    %vm512 = vcmp.gt.f32.partialorder %v228, 0.0
    %vm513 = vcmp.gt.f32.partialorder %v234, 0.0
    %vm514 = vcmp.gt.f32.partialorder %v238, 0.0
    %vm515 = vcmp.gt.f32.partialorder %v244, 0.0
    %vm516 = vcmp.gt.f32.partialorder %v248, 0.0
    %vm517 = vcmp.gt.f32.partialorder %v254, 0.0
    %vm518 = vcmp.gt.f32.partialorder %v258, 0.0
    %vm519 = vcmp.gt.f32.partialorder %v264, 0.0
    %vm520 = vcmp.gt.f32.partialorder %v268, 0.0
    %vm521 = vcmp.gt.f32.partialorder %v274, 0.0
    %vm522 = vcmp.gt.f32.partialorder %v278, 0.0
    %vm523 = vcmp.gt.f32.partialorder %v284, 0.0
    %vm524 = vcmp.gt.f32.partialorder %v288, 0.0
    %v525 = vmul.f32 %v214, 0.2
    %v526 = vmul.f32 %v218, 0.2
    %v527 = vmul.f32 %v224, 0.2
    %v528 = vmul.f32 %v228, 0.2
    %v529 = vmul.f32 %v234, 0.2
    %v530 = vmul.f32 %v238, 0.2
    %v531 = vmul.f32 %v244, 0.2
    %v532 = vmul.f32 %v248, 0.2
    %v533 = vmul.f32 %v254, 0.2
    %v534 = vmul.f32 %v258, 0.2
    %v535 = vmul.f32 %v264, 0.2
    %v536 = vmul.f32 %v268, 0.2
    %v537 = vmul.f32 %v274, 0.2
    %v538 = vmul.f32 %v278, 0.2
    %v539 = vmul.f32 %v284, 0.2
    %v540 = vmul.f32 %v288, 0.2
    %v541 = vsel %vm509, %v214, %v525
    %v542 = vsel %vm510, %v218, %v526
    %v543 = vsel %vm511, %v224, %v527
    %v544 = vsel %vm512, %v228, %v528
    %v545 = vsel %vm513, %v234, %v529
    %v546 = vsel %vm514, %v238, %v530
    %v547 = vsel %vm515, %v244, %v531
    %v548 = vsel %vm516, %v248, %v532
    %v549 = vsel %vm517, %v254, %v533
    %v550 = vsel %vm518, %v258, %v534
    %v551 = vsel %vm519, %v264, %v535
    %v552 = vsel %vm520, %v268, %v536
    %v553 = vsel %vm521, %v274, %v537
    %v554 = vsel %vm522, %v278, %v538
    %v555 = vsel %vm523, %v284, %v539
    %v556 = vsel %vm524, %v288, %v540
    %v557 = vsub.f32 0.0, %v541
    %v558 = vsub.f32 0.0, %v542
    %v559 = vsub.f32 0.0, %v543
    %v560 = vsub.f32 0.0, %v544
    %v561 = vsub.f32 0.0, %v545
    %v562 = vsub.f32 0.0, %v546
    %v563 = vsub.f32 0.0, %v547
    %v564 = vsub.f32 0.0, %v548
    %v565 = vsub.f32 0.0, %v549
    %v566 = vsub.f32 0.0, %v550
    %v567 = vsub.f32 0.0, %v551
    %v568 = vsub.f32 0.0, %v552
    %v569 = vsub.f32 0.0, %v553
    %v570 = vsub.f32 0.0, %v554
    %v571 = vsub.f32 0.0, %v555
    %v572 = vsub.f32 0.0, %v556
    %v573 = vmul.f32 %v557, 1.442695
    %v574 = vpow.pop %v573
    %v575 = vmul.f32 %v558, 1.442695
    %v576 = vpow.pop %v575
    %v577 = vmul.f32 %v559, 1.442695
    %v578 = vpow.pop %v577
    %v579 = vmul.f32 %v560, 1.442695
    %v580 = vpow.pop %v579
    %v581 = vmul.f32 %v561, 1.442695
    %v582 = vpow.pop %v581
    %v583 = vmul.f32 %v562, 1.442695
    %v584 = vpow.pop %v583
    %v585 = vmul.f32 %v563, 1.442695
    %v586 = vpow.pop %v585
    %v587 = vmul.f32 %v564, 1.442695
    %v588 = vpow.pop %v587
    %v589 = vmul.f32 %v565, 1.442695
    %v590 = vpow.pop %v589
    %v591 = vmul.f32 %v566, 1.442695
    %v592 = vpow.pop %v591
    %v593 = vmul.f32 %v567, 1.442695
    %v594 = vpow.pop %v593
    %v595 = vmul.f32 %v568, 1.442695
    %v596 = vpow.pop %v595
    %v597 = vmul.f32 %v569, 1.442695
    %v598 = vpow.pop %v597
    %v599 = vmul.f32 %v570, 1.442695
    %v600 = vpow.pop %v599
    %v601 = vmul.f32 %v571, 1.442695
    %v602 = vpow.pop %v601
    %v603 = vmul.f32 %v572, 1.442695
    %v604 = vpow.pop %v603
    %v605 = vsel %vm388, 1.0, %v214
    %v606 = vsel %vm388, 1.0, %v218
    %v607 = vsel %vm388, 1.0, %v224
    %v608 = vsel %vm388, 1.0, %v228
    %v609 = vsel %vm388, 1.0, %v234
    %v610 = vsel %vm388, 1.0, %v238
    %v611 = vsel %vm388, 1.0, %v244
    %v612 = vsel %vm388, 1.0, %v248
    %v613 = vsel %vm388, 1.0, %v254
    %v614 = vsel %vm388, 1.0, %v258
    %v615 = vsel %vm388, 1.0, %v264
    %v616 = vsel %vm388, 1.0, %v268
    %v617 = vsel %vm388, 1.0, %v274
    %v618 = vsel %vm388, 1.0, %v278
    %v619 = vsel %vm388, 1.0, %v284
    %v620 = vsel %vm388, 1.0, %v288
    %622 = vset.pattern.permute.xlu0 100
    %623 = vperm.xlu0 %622, %v574
    %v624 = vpop.permute.xlu0 %623
    %627 = vset.pattern.permute.xlu0 100
    %628 = vperm.xlu0 %627, %v576
    %v629 = vpop.permute.xlu0 %628
    %632 = vset.pattern.permute.xlu0 100
    %633 = vperm.xlu0 %632, %v578
    %v634 = vpop.permute.xlu0 %633
    %637 = vset.pattern.permute.xlu0 100
    %638 = vperm.xlu0 %637, %v580
    %v639 = vpop.permute.xlu0 %638
    %642 = vset.pattern.permute.xlu0 100
    %643 = vperm.xlu0 %642, %v582
    %v644 = vpop.permute.xlu0 %643
    %647 = vset.pattern.permute.xlu0 100
    %648 = vperm.xlu0 %647, %v584
    %v649 = vpop.permute.xlu0 %648
    %652 = vset.pattern.permute.xlu0 100
    %653 = vperm.xlu0 %652, %v586
    %v654 = vpop.permute.xlu0 %653
    %657 = vset.pattern.permute.xlu0 100
    %658 = vperm.xlu0 %657, %v588
    %v659 = vpop.permute.xlu0 %658
    %662 = vset.pattern.permute.xlu0 100
    %663 = vperm.xlu0 %662, %v590
    %v664 = vpop.permute.xlu0 %663
    %667 = vset.pattern.permute.xlu0 100
    %668 = vperm.xlu0 %667, %v592
    %v669 = vpop.permute.xlu0 %668
    %672 = vset.pattern.permute.xlu0 100
    %673 = vperm.xlu0 %672, %v594
    %v674 = vpop.permute.xlu0 %673
    %677 = vset.pattern.permute.xlu0 100
    %678 = vperm.xlu0 %677, %v596
    %v679 = vpop.permute.xlu0 %678
    %682 = vset.pattern.permute.xlu0 100
    %683 = vperm.xlu0 %682, %v598
    %v684 = vpop.permute.xlu0 %683
    %687 = vset.pattern.permute.xlu0 100
    %688 = vperm.xlu0 %687, %v600
    %v689 = vpop.permute.xlu0 %688
    %692 = vset.pattern.permute.xlu0 100
    %693 = vperm.xlu0 %692, %v602
    %v694 = vpop.permute.xlu0 %693
    %697 = vset.pattern.permute.xlu0 100
    %698 = vperm.xlu0 %697, %v604
    %v699 = vpop.permute.xlu0 %698
    %v701 = vmul.f32 %v605, %v624
    %v702 = vmul.f32 %v606, %v629
    %v703 = vmul.f32 %v607, %v634
    %v704 = vmul.f32 %v608, %v639
    %v705 = vmul.f32 %v609, %v644
    %v706 = vmul.f32 %v610, %v649
    %v707 = vmul.f32 %v611, %v654
    %v708 = vmul.f32 %v612, %v659
    %v709 = vmul.f32 %v613, %v664
    %v710 = vmul.f32 %v614, %v669
    %v711 = vmul.f32 %v615, %v674
    %v712 = vmul.f32 %v616, %v679
    %v713 = vmul.f32 %v617, %v684
    %v714 = vmul.f32 %v618, %v689
    %v715 = vmul.f32 %v619, %v694
    %v716 = vmul.f32 %v620, %v699
    %v717 = vpack.c.bf16 %v702, %v701
    %v718 = vpack.c.bf16 %v704, %v703
    %v719 = vpack.c.bf16 %v706, %v705
    %v720 = vpack.c.bf16 %v708, %v707
    %v721 = vpack.c.bf16 %v710, %v709
    %v722 = vpack.c.bf16 %v712, %v711
    %v723 = vpack.c.bf16 %v714, %v713
    %v724 = vpack.c.bf16 %v716, %v715
    %v725 = vld [vmem:[%s0] sm:$0x1]
    %v726 = vlaneseq
    %v727 = vshrl.u32 %v726, 7
    %v728 = vadd.s32 %v727, 8
    %s729 = smul.u32 0, 16
    %v730 = vstv %s729
    %v731 = vadd.s32 %v727, %v730
    %v732 = vadd.s32 %v728, %v730
    %v733 = vlaneseq
    %v734 = vshrl.u32 %v733, 7
    %v735 = vsub.s32 0, %v734
    %v736 = vrot.slane %v725, %v735
    %vm737 = vcmp.eq.s32.totalorder %v731, %v736
    %vm738 = vcmp.eq.s32.totalorder %v732, %v736
    %v739 = vsel %vm737, 1, 0
    %v740 = vsel %vm738, 1, 0
    %v741 = vcvt.s32.f32 %v739
    %v742 = vcvt.s32.f32 %v740
    %v743 = vpack.c.bf16 %v742, %v741
    %v744 = vld [vmem:[#allocation2] sm:$0xff]
    %v745 = vld [vmem:[#allocation2 + $0x8] sm:$0xff]
    %v746 = vld [vmem:[#allocation2 + $0x10] sm:$0xff]
    %v747 = vld [vmem:[#allocation2 + $0x18] sm:$0xff]
    %748 = vmatprep.subr.bf16.mxu0 %v724
    %749 = vmatpush1.bf16.msra.mxu0 %v508
    %750 = vmatprep.subr.bf16.mxu0 %v723
    %751 = vmatpush1.bf16.msra.mxu0 %v507
    %752 = vmatprep.subr.bf16.mxu0 %v722
    %753 = vmatpush1.bf16.msra.mxu0 %v506
    %754 = vmatprep.subr.bf16.mxu0 %v721
    %755 = vmatpush1.bf16.msra.mxu0 %v505
    %756 = vmatprep.subr.bf16.mxu0 %v720
    %757 = vmatpush1.bf16.msra.mxu0 %v504
    %758 = vmatprep.subr.bf16.mxu0 %v719
    %759 = vmatpush1.bf16.msra.mxu0 %v503
    %760 = vmatprep.subr.bf16.mxu0 %v718
    %761 = vmatpush1.bf16.msra.mxu0 %v502
    %762 = vmatprep.subr.bf16.mxu0 %v717
    %763 = vmatpush1.bf16.msra.mxu0 %v501
    %764 = vmatprep.subr.bf16.mxu0 0
    %765 = vmatpush2.bf16.msra.mxu0 0
    %766 = vmatprep.subr.bf16.mxu0 0
    %767 = vmatpush2.bf16.msra.mxu0 0
    %768 = vmatprep.subr.bf16.mxu0 0
    %769 = vmatpush2.bf16.msra.mxu0 0
    %770 = vmatprep.subr.bf16.mxu0 0
    %771 = vmatpush2.bf16.msra.mxu0 0
    %772 = vmatprep.subr.bf16.mxu0 0
    %773 = vmatpush2.bf16.msra.mxu0 0
    %774 = vmatprep.subr.bf16.mxu0 0
    %775 = vmatpush2.bf16.msra.mxu0 0
    %776 = vmatprep.subr.bf16.mxu0 0
    %777 = vmatpush2.bf16.msra.mxu0 0
    %778 = vmatprep.subr.bf16.mxu0 0
    %779 = vmatpush2.bf16.msra.mxu0 0
    %780 = vmatprep.mubr.bf16.mxu0 0
    %781 = vmatmul.mubr.bf16.gmra.mxu0 %v743
    %v782 = vpop.f32.mrf.mxu0
    %v783 = vadd.f32 0.0, %v782
    %v784 = vpop.f32.mrf.mxu0
    %v785 = vadd.f32 0.0, %v784
    %v786 = vpop.f32.mrf.mxu0
    %v787 = vadd.f32 0.0, %v786
    %v788 = vpop.f32.mrf.mxu0
    %v789 = vadd.f32 0.0, %v788
    %790 = vdwg.mxu0
    %v791 = vadd.f32 %v744, %v783
    %v792 = vadd.f32 %v745, %v785
    %v793 = vadd.f32 %v746, %v787
    %v794 = vadd.f32 %v747, %v789
    %795 = vst [vmem:[#allocation2] sm:$0xff] %v791
    %796 = vst [vmem:[#allocation2 + $0x8] sm:$0xff] %v792
    %797 = vst [vmem:[#allocation2 + $0x10] sm:$0xff] %v793
    %798 = vst [vmem:[#allocation2 + $0x18] sm:$0xff] %v794
    // Predicated region
    $region18: #{tpu_custom_call.1} parent=1 // pred_check
      %p799 = pneg %p16
    $region19: #{tpu_custom_call.1} parent=1 // pred_check_branch
      %801 = sbr.rel (%p799) target = $region21
    $region20: #{tpu_custom_call.1} parent=1 // pred_region
      %v802 = vld [vmem:[#allocation2] sm:$0xff]
      %v803 = vld [vmem:[#allocation2 + $0x8] sm:$0xff]
      %v804 = vld [vmem:[#allocation2 + $0x10] sm:$0xff]
      %v805 = vld [vmem:[#allocation2 + $0x18] sm:$0xff]
      %v806 = vmax.f32 %v802, 1e-12
      %v807 = vmax.f32 %v804, 1e-12
      %v808 = vrcp.pop %v806
      %v809 = vrcp.pop %v807
      %811 = vset.pattern.permute.xlu0 100
      %812 = vperm.xlu0 %811, %v808
      %v813 = vpop.permute.xlu0 %812
      %816 = vset.pattern.permute.xlu0 100
      %817 = vperm.xlu0 %816, %v809
      %v818 = vpop.permute.xlu0 %817
      %v820 = vmul.f32 %v802, %v813
      %v821 = vmul.f32 %v804, %v818
      %vm822 = vcmp.gt.f32.partialorder %v820, 0.0
      %vm823 = vcmp.gt.f32.partialorder %v821, 0.0
      %v824 = vmul.f32 %v820, 1.442695
      %v825 = vpow.pop %v824
      %v826 = vmul.f32 %v821, 1.442695
      %v827 = vpow.pop %v826
      %v828 = vsub.f32 %v825, 1.0
      %v829 = vsub.f32 %v827, 1.0
      %v830 = vsel %vm822, %v820, %v828
      %v831 = vsel %vm823, %v821, %v829
      %v832 = vmax.f32 %v803, 1e-12
      %v833 = vmax.f32 %v805, 1e-12
      %v834 = vrcp.pop %v832
      %v835 = vrcp.pop %v833
      %837 = vset.pattern.permute.xlu0 100
      %838 = vperm.xlu0 %837, %v834
      %v839 = vpop.permute.xlu0 %838
      %842 = vset.pattern.permute.xlu0 100
      %843 = vperm.xlu0 %842, %v835
      %v844 = vpop.permute.xlu0 %843
      %v846 = vmul.f32 %v803, %v839
      %v847 = vmul.f32 %v805, %v844
      %vm848 = vcmp.gt.f32.partialorder %v846, 0.0
      %vm849 = vcmp.gt.f32.partialorder %v847, 0.0
      %v850 = vmul.f32 %v846, 1.442695
      %v851 = vpow.pop %v850
      %v852 = vmul.f32 %v847, 1.442695
      %v853 = vpow.pop %v852
      %v854 = vsub.f32 %v851, 1.0
      %v855 = vsub.f32 %v853, 1.0
      %v856 = vsel %vm848, %v846, %v854
      %v857 = vsel %vm849, %v847, %v855
      %860 = vrot.lane.b32.xlu0 %v856, 100
      %v861 = vpop.permute.xlu0 %860
      %862 = vrot.lane.b32.xlu0 %v857, 100
      %v863 = vpop.permute.xlu0 %862
      %vm866 = vcmask 818176
      %v867 = vsel %vm866, %v830, %v861
      %v868 = vsel %vm866, %v831, %v863
      %869 = vst [vmem:[#allocation3] sm:$0xff] %v867
      %vm870 = vcmask 588800
      %871 = vst.msk [vmem:[#allocation3 + $0x8] sm:$0xff] %vm870, %v861
      %872 = vst [vmem:[#allocation3 + $0x10] sm:$0xff] %v868
      %873 = vst.msk [vmem:[#allocation3 + $0x18] sm:$0xff] %vm870, %v863
    $region21: #{tpu_custom_call.1} parent=1 // pred_fallthru
      _
    // Predicated region
    $region22: #{tpu_custom_call.1} parent=1 // pred_check
      _
    $region23: #{tpu_custom_call.1} parent=1 // pred_check_branch
      %875 = sbr.rel (0) target = $region25
    $region24: #{tpu_custom_call.1} parent=1 // pred_region
      %s877 = ssub.s32 512, 512
      %878 = vsyncadd [#allocation4], %s877
      %s879 = sshll.u32 [#allocation3], 4
      %s880 = int_to_ptr.vmem [resolvable:$true] %s879
      %885 = dma.vmem_to_hbm [thread:$0]  %s880, 512, %s3, [#allocation4], 256, 256, 16
    $region25: #{tpu_custom_call.1} parent=1 // pred_fallthru
      _
    // Predicated region
    $region26: #{tpu_custom_call.1} parent=1 // pred_check
      _
    $region27: #{tpu_custom_call.1} parent=1 // pred_check_branch
      %887 = sbr.rel (0) target = $region29
    $region28: #{tpu_custom_call.1} parent=1 // pred_region
      %888 = dma.done [#allocation4], 512
    $region29: #{tpu_custom_call.1} parent=1 // pred_fallthru
      _
    %889 = vsyncpa [#allocation4], 1

</llo_original>
